<compile_context>
chip_gen: v6e
topology: v6e:2x2x1
jax: 0.10.0
libtpu: 0.0.40
codegen_flags: <defaults>
</compile_context>

<pallas_src>
import functools

import jax
import jax.numpy as jnp
from jax.experimental import pallas as pl
from jax.experimental.pallas import tpu as pltpu

_HIDDEN_PAD = 128          # lane-dense width for the tiny hidden layers
_VMEM_LIMIT = 48 << 20     # see budget in header


def _round_up(x, m):
    return (x + m - 1) // m * m


def _cdiv(a, b):
    return -(-a // b)


# --------------------------------------------------------------------------- #
# Kernel
# --------------------------------------------------------------------------- #
def sae_kernel(x_ref,
               w1_ref, b1_ref,
               w2_ref, b2_ref,
               w3_ref, b3_ref,
               w4_ref, b4_ref,
               o_ref):
    """Whole 4-layer MLP hot path for one batch tile, entirely in VMEM.

    x / weights are bf16 (MXU inputs), accumulation is f32, sigmoid is f32
    (EUP), output is written back lane-dense in the IO dtype (bf16).
    Hidden dims are padded to 128 with zero weights; the resulting
    sigmoid(0)=0.5 ghost columns meet zero weight rows in the next layer and
    contribute exactly nothing.
    """
    x = x_ref[...]                                    # (bt, n_pad) bf16

    h = jnp.dot(x, w1_ref[...], preferred_element_type=jnp.float32) + b1_ref[...]
    h = jax.nn.sigmoid(h)                             # f32 (bt, 128)

    h = jnp.dot(h.astype(w2_ref.dtype), w2_ref[...],
                preferred_element_type=jnp.float32) + b2_ref[...]
    h = jax.nn.sigmoid(h)

    h = jnp.dot(h.astype(w3_ref.dtype), w3_ref[...],
                preferred_element_type=jnp.float32) + b3_ref[...]
    h = jax.nn.sigmoid(h)

    out = jnp.dot(h.astype(w4_ref.dtype), w4_ref[...],
                  preferred_element_type=jnp.float32) + b4_ref[...]
    o_ref[...] = out.astype(o_ref.dtype)              # (bt, n_pad) lane-dense


# --------------------------------------------------------------------------- #
# One-time parameter preparation (padding + casting hoisted out of the call)
# --------------------------------------------------------------------------- #
def prepare_params(params, nb_movies, *, io_dtype=jnp.bfloat16):
    """Pad / cast the tiny SAE weights once. Returns a dict consumed by
    sae_forward; doing this per call would add needless HBM passes."""
    n_pad = _round_up(nb_movies, 128)
    H = _HIDDEN_PAD
    f32 = jnp.float32

    w1 = jnp.zeros((n_pad, H), io_dtype).at[:nb_movies, :20].set(
        params["w1"].astype(io_dtype))
    b1 = jnp.zeros((1, H), f32).at[:, :20].set(params["b1"].astype(f32))

    w2 = jnp.zeros((H, H), io_dtype).at[:20, :10].set(params["w2"].astype(io_dtype))
    b2 = jnp.zeros((1, H), f32).at[:, :10].set(params["b2"].astype(f32))

    w3 = jnp.zeros((H, H), io_dtype).at[:10, :20].set(params["w3"].astype(io_dtype))
    b3 = jnp.zeros((1, H), f32).at[:, :20].set(params["b3"].astype(f32))

    w4 = jnp.zeros((H, n_pad), io_dtype).at[:20, :nb_movies].set(
        params["w4"].astype(io_dtype))
    b4 = jnp.zeros((1, n_pad), f32).at[:, :nb_movies].set(params["b4"].astype(f32))

    return {
        "nb_movies": nb_movies,
        "n_pad": n_pad,
        "io_dtype": jnp.dtype(io_dtype),
        "w1": w1, "b1": b1, "w2": w2, "b2": b2,
        "w3": w3, "b3": b3, "w4": w4, "b4": b4,
    }


def _choose_tile(batch, batch_tile, min_grid_steps):
    """16-row-aligned batch tile; aims for >= min_grid_steps grid steps so the
    'parallel' batch axis can shard across both v7x TensorCores."""
    steps = max(int(min_grid_steps), 1)
    bt = max(16, _round_up(_cdiv(batch, steps), 16))
    bt = min(int(batch_tile), bt)
    b_pad = _round_up(batch, bt)
    return bt, b_pad


def padded_input_shape(batch, nb_movies, *, batch_tile=1024, min_grid_steps=2):
    """Shape a producer should pre-pad x to for the zero-copy fast path."""
    _, b_pad = _choose_tile(batch, batch_tile, min_grid_steps)
    return b_pad, _round_up(nb_movies, 128)


# --------------------------------------------------------------------------- #
# Forward pass
# --------------------------------------------------------------------------- #
def sae_forward(x, prep, *, batch_tile=1024, min_grid_steps=2,
                return_padded=False):
    """x: (B, nb_movies) or pre-padded (b_pad, n_pad) in prep['io_dtype'].
    prep: output of prepare_params. Returns (B, nb_movies) io_dtype, or the
    raw padded (b_pad, n_pad) buffer when return_padded=True (padded output
    columns are exactly zero; padded rows are bias-chain junk)."""
    io_dtype = prep["io_dtype"]
    nb_movies = prep["nb_movies"]
    n_pad = prep["n_pad"]

    B = x.shape[0]
    bt, b_pad = _choose_tile(B, batch_tile, min_grid_steps)

    if x.shape == (b_pad, n_pad) and x.dtype == io_dtype:
        xp = x      # fast path: no extra HBM pad/cast pass
    else:
        # Extra HBM pass -- prefer feeding pre-padded bf16 x (padded_input_shape).
        xp = jnp.zeros((b_pad, n_pad), io_dtype).at[:B, :x.shape[1]].set(
            x.astype(io_dtype))

    w1, b1 = prep["w1"], prep["b1"]
    w2, b2 = prep["w2"], prep["b2"]
    w3, b3 = prep["w3"], prep["b3"]
    w4, b4 = prep["w4"], prep["b4"]

    def full(arr):
        nd = arr.ndim
        return pl.BlockSpec(arr.shape, lambda i, _nd=nd: (0,) * _nd)

    grid = (b_pad // bt,)

    itemsize = io_dtype.itemsize
    H = _HIDDEN_PAD
    weights_bytes = sum(int(a.size) * a.dtype.itemsize
                        for a in (w1, b1, w2, b2, w3, b3, w4, b4))
    flops = 2 * b_pad * (n_pad * H + H * H + H * H + H * n_pad)
    transcendentals = b_pad * 3 * H
    bytes_accessed = 2 * b_pad * n_pad * itemsize + weights_bytes

    out = pl.pallas_call(
        sae_kernel,
        out_shape=jax.ShapeDtypeStruct((b_pad, n_pad), io_dtype),
        grid_spec=pltpu.PrefetchScalarGridSpec(
            num_scalar_prefetch=0,
            grid=grid,
            in_specs=[
                pl.BlockSpec((bt, n_pad), lambda i: (i, 0)),   # x tile
                full(w1), full(b1),
                full(w2), full(b2),
                full(w3), full(b3),
                full(w4), full(b4),
            ],
            out_specs=pl.BlockSpec((bt, n_pad), lambda i: (i, 0)),
        ),
        compiler_params=pltpu.CompilerParams(
            dimension_semantics=("parallel",),   # batch axis -> both TCs on v7x
            vmem_limit_bytes=_VMEM_LIMIT,        # ~24 MiB used at bt=1024
        ),
        cost_estimate=pl.CostEstimate(
            flops=int(flops),
            transcendentals=int(transcendentals),
            bytes_accessed=int(bytes_accessed),
        ),
    )(xp, w1, b1, w2, b2, w3, b3, w4, b4)

    if return_padded:
        return out
    return out[:B, :nb_movies]


# --------------------------------------------------------------------------- #
# Init + references
# --------------------------------------------------------------------------- #
def init_params(key, nb_movies):
    """Deterministic init mimicking PyTorch Linear's U(-1/sqrt(fan_in), ...)."""
    dims = [(nb_movies, 20), (20, 10), (10, 20), (20, nb_movies)]
    params = {}
    keys = jax.random.split(key, 2 * len(dims))
    for idx, (fan_in, fan_out) in enumerate(dims):
        bound = 1.0 / (fan_in ** 0.5)
        params[f"w{idx + 1}"] = jax.random.uniform(
            keys[2 * idx], (fan_in, fan_out),
            minval=-bound, maxval=bound, dtype=jnp.float32)
        params[f"b{idx + 1}"] = jax.random.uniform(
            keys[2 * idx + 1], (1, fan_out),
            minval=-bound, maxval=bound, dtype=jnp.float32)
    return params


def sae_reference_f32(x, params):
    """True f32 reference matching the PyTorch module."""
    h = jax.nn.sigmoid(x @ params["w1"] + params["b1"])
    h = jax.nn.sigmoid(h @ params["w2"] + params["b2"])
    h = jax.nn.sigmoid(h @ params["w3"] + params["b3"])
    return h @ params["w4"] + params["b4"]


def sae_reference_matched(x, params, io_dtype=jnp.bfloat16):
    """Pure-JAX reference mirroring the kernel's dtype strategy (bf16 MXU
    inputs, f32 accumulation, f32 sigmoid, io_dtype output)."""
    def lin(h, w, b):
        return jnp.dot(h.astype(io_dtype), w.astype(io_dtype),
                       preferred_element_type=jnp.float32) + b
    h = jax.nn.sigmoid(lin(x, params["w1"], params["b1"]))
    h = jax.nn.sigmoid(lin(h, params["w2"], params["b2"]))
    h = jax.nn.sigmoid(lin(h, params["w3"], params["b3"]))
    return lin(h, params["w4"], params["b4"]).astype(io_dtype)


# --------------------------------------------------------------------------- #
# Demo / self-test
# --------------------------------------------------------------------------- #
if __name__ == "__main__":
    # Small demo shapes; nb_movies deliberately NOT a multiple of 128 and
    # batch NOT a multiple of 16 to exercise the padding paths.
    nb_movies = 200
    batch = 6

    key = jax.random.PRNGKey(0)
    k_params, k_x = jax.random.split(key)

    params = init_params(k_params, nb_movies)
    prep = prepare_params(params, nb_movies)

    # Recommender input: dense user->movie rating vector (mostly zeros).
    x = jax.random.uniform(k_x, (batch, nb_movies), dtype=jnp.float32)
    x = jnp.where(x > 0.8, x * 5.0, 0.0)

    # Path 1: plain f32 x (wrapper pads/casts -> extra HBM pass, correctness path).
    out = sae_forward(x, prep)
    out = jax.block_until_ready(out)
    assert out.shape == (batch, nb_movies)

    ref_match = sae_reference_matched(x, params)
    ref_f32 = sae_reference_f32(x, params)
    err_match = jnp.max(jnp.abs(out.astype(jnp.float32) - ref_match.astype(jnp.float32)))
    err_f32 = jnp.max(jnp.abs(out.astype(jnp.float32) - ref_f32))
    assert err_match < 3e-2, f"mismatch vs matched-precision reference: {err_match}"
    assert err_f32 < 6e-2, f"mismatch vs f32 reference: {err_f32}"

    # Path 2: producer-side pre-padded bf16 x (zero extra HBM passes).
    b_pad, n_pad = padded_input_shape(batch, nb_movies)
    xp = jnp.zeros((b_pad, n_pad), jnp.bfloat16).at[:batch, :nb_movies].set(
        x.astype(jnp.bfloat16))
    out_pad = sae_forward(xp, prep, return_padded=True)
    out_pad = jax.block_until_ready(out_pad)
    assert out_pad.shape == (b_pad, n_pad)
    err_fast = jnp.max(jnp.abs(
        out_pad[:batch, :nb_movies].astype(jnp.float32) - out.astype(jnp.float32)))
    assert err_fast < 1e-6, f"pre-padded fast path diverges: {err_fast}"
    # padded output columns must be exactly zero
    assert jnp.all(out_pad[:, nb_movies:] == 0)

    print("KERNEL_OK")
</pallas_src>

<mosaic_0001>
module attributes {stable_mosaic.version = 11 : i64} {
  func.func @sae_kernel(%arg0: i32, %arg1: memref<16x256xbf16, #tpu.memory_space<vmem>>, %arg2: memref<256x128xbf16, #tpu.memory_space<vmem>>, %arg3: memref<1x128xf32, #tpu.memory_space<vmem>>, %arg4: memref<128x128xbf16, #tpu.memory_space<vmem>>, %arg5: memref<1x128xf32, #tpu.memory_space<vmem>>, %arg6: memref<128x128xbf16, #tpu.memory_space<vmem>>, %arg7: memref<1x128xf32, #tpu.memory_space<vmem>>, %arg8: memref<128x256xbf16, #tpu.memory_space<vmem>>, %arg9: memref<1x256xf32, #tpu.memory_space<vmem>>, %arg10: memref<16x256xbf16, #tpu.memory_space<vmem>>) attributes {dimension_semantics = [#tpu.dimension_semantics<parallel>], iteration_bounds = array<i64: 1>, scalar_prefetch = 0 : i64, scratch_operands = 0 : i64, tpu.core_type = #tpu.core_type<tc>, window_params = [{transform_indices = @transform_0, window_bounds = array<i64: 16, 256>}, {pipeline_mode = #tpu.pipeline_mode<synchronous>, transform_indices = @transform_1, window_bounds = array<i64: 256, 128>}, {pipeline_mode = #tpu.pipeline_mode<synchronous>, transform_indices = @transform_2, window_bounds = array<i64: 1, 128>}, {pipeline_mode = #tpu.pipeline_mode<synchronous>, transform_indices = @transform_3, window_bounds = array<i64: 128, 128>}, {pipeline_mode = #tpu.pipeline_mode<synchronous>, transform_indices = @transform_4, window_bounds = array<i64: 1, 128>}, {pipeline_mode = #tpu.pipeline_mode<synchronous>, transform_indices = @transform_5, window_bounds = array<i64: 128, 128>}, {pipeline_mode = #tpu.pipeline_mode<synchronous>, transform_indices = @transform_6, window_bounds = array<i64: 1, 128>}, {pipeline_mode = #tpu.pipeline_mode<synchronous>, transform_indices = @transform_7, window_bounds = array<i64: 128, 256>}, {pipeline_mode = #tpu.pipeline_mode<synchronous>, transform_indices = @transform_8, window_bounds = array<i64: 1, 256>}, {transform_indices = @transform_9, window_bounds = array<i64: 16, 256>}]} {
    %c0 = arith.constant 0 : index
    %c0_0 = arith.constant 0 : index
    %0 = vector.load %arg1[%c0, %c0_0] : memref<16x256xbf16, #tpu.memory_space<vmem>>, vector<16x256xbf16>
    %c0_1 = arith.constant 0 : index
    %c0_2 = arith.constant 0 : index
    %1 = vector.load %arg2[%c0_1, %c0_2] : memref<256x128xbf16, #tpu.memory_space<vmem>>, vector<256x128xbf16>
    %cst = arith.constant dense<0.000000e+00> : vector<16x128xf32>
    %2 = tpu.matmul %0, %1, %cst {dimension_numbers = #tpu.dot_dimension_numbers<[1], [0], [0], [1], [0, 0, 1, 1], [], []>} : vector<16x256xbf16>, vector<256x128xbf16>, vector<16x128xf32> -> vector<16x128xf32>
    %c0_3 = arith.constant 0 : index
    %c0_4 = arith.constant 0 : index
    %3 = vector.load %arg3[%c0_3, %c0_4] : memref<1x128xf32, #tpu.memory_space<vmem>>, vector<1x128xf32>
    %4 = vector.broadcast %3 : vector<1x128xf32> to vector<16x128xf32>
    %5 = arith.addf %2, %4 : vector<16x128xf32>
    %6 = arith.negf %5 : vector<16x128xf32>
    %7 = math.exp %6 : vector<16x128xf32>
    %cst_5 = arith.constant 1.000000e+00 : f32
    %8 = vector.broadcast %cst_5 : f32 to vector<16x128xf32>
    %9 = arith.addf %8, %7 : vector<16x128xf32>
    %10 = arith.divf %8, %9 : vector<16x128xf32>
    %11 = arith.truncf %10 : vector<16x128xf32> to vector<16x128xbf16>
    %c0_6 = arith.constant 0 : index
    %c0_7 = arith.constant 0 : index
    %12 = vector.load %arg4[%c0_6, %c0_7] : memref<128x128xbf16, #tpu.memory_space<vmem>>, vector<128x128xbf16>
    %cst_8 = arith.constant dense<0.000000e+00> : vector<16x128xf32>
    %13 = tpu.matmul %11, %12, %cst_8 {dimension_numbers = #tpu.dot_dimension_numbers<[1], [0], [0], [1], [0, 0, 1, 1], [], []>} : vector<16x128xbf16>, vector<128x128xbf16>, vector<16x128xf32> -> vector<16x128xf32>
    %c0_9 = arith.constant 0 : index
    %c0_10 = arith.constant 0 : index
    %14 = vector.load %arg5[%c0_9, %c0_10] : memref<1x128xf32, #tpu.memory_space<vmem>>, vector<1x128xf32>
    %15 = vector.broadcast %14 : vector<1x128xf32> to vector<16x128xf32>
    %16 = arith.addf %13, %15 : vector<16x128xf32>
    %17 = arith.negf %16 : vector<16x128xf32>
    %18 = math.exp %17 : vector<16x128xf32>
    %cst_11 = arith.constant 1.000000e+00 : f32
    %19 = vector.broadcast %cst_11 : f32 to vector<16x128xf32>
    %20 = arith.addf %19, %18 : vector<16x128xf32>
    %21 = arith.divf %19, %20 : vector<16x128xf32>
    %22 = arith.truncf %21 : vector<16x128xf32> to vector<16x128xbf16>
    %c0_12 = arith.constant 0 : index
    %c0_13 = arith.constant 0 : index
    %23 = vector.load %arg6[%c0_12, %c0_13] : memref<128x128xbf16, #tpu.memory_space<vmem>>, vector<128x128xbf16>
    %cst_14 = arith.constant dense<0.000000e+00> : vector<16x128xf32>
    %24 = tpu.matmul %22, %23, %cst_14 {dimension_numbers = #tpu.dot_dimension_numbers<[1], [0], [0], [1], [0, 0, 1, 1], [], []>} : vector<16x128xbf16>, vector<128x128xbf16>, vector<16x128xf32> -> vector<16x128xf32>
    %c0_15 = arith.constant 0 : index
    %c0_16 = arith.constant 0 : index
    %25 = vector.load %arg7[%c0_15, %c0_16] : memref<1x128xf32, #tpu.memory_space<vmem>>, vector<1x128xf32>
    %26 = vector.broadcast %25 : vector<1x128xf32> to vector<16x128xf32>
    %27 = arith.addf %24, %26 : vector<16x128xf32>
    %28 = arith.negf %27 : vector<16x128xf32>
    %29 = math.exp %28 : vector<16x128xf32>
    %cst_17 = arith.constant 1.000000e+00 : f32
    %30 = vector.broadcast %cst_17 : f32 to vector<16x128xf32>
    %31 = arith.addf %30, %29 : vector<16x128xf32>
    %32 = arith.divf %30, %31 : vector<16x128xf32>
    %33 = arith.truncf %32 : vector<16x128xf32> to vector<16x128xbf16>
    %c0_18 = arith.constant 0 : index
    %c0_19 = arith.constant 0 : index
    %34 = vector.load %arg8[%c0_18, %c0_19] : memref<128x256xbf16, #tpu.memory_space<vmem>>, vector<128x256xbf16>
    %cst_20 = arith.constant dense<0.000000e+00> : vector<16x256xf32>
    %35 = tpu.matmul %33, %34, %cst_20 {dimension_numbers = #tpu.dot_dimension_numbers<[1], [0], [0], [1], [0, 0, 1, 1], [], []>} : vector<16x128xbf16>, vector<128x256xbf16>, vector<16x256xf32> -> vector<16x256xf32>
    %c0_21 = arith.constant 0 : index
    %c0_22 = arith.constant 0 : index
    %36 = vector.load %arg9[%c0_21, %c0_22] : memref<1x256xf32, #tpu.memory_space<vmem>>, vector<1x256xf32>
    %37 = vector.broadcast %36 : vector<1x256xf32> to vector<16x256xf32>
    %38 = arith.addf %35, %37 : vector<16x256xf32>
    %39 = arith.truncf %38 : vector<16x256xf32> to vector<16x256xbf16>
    %c0_23 = arith.constant 0 : index
    %c0_24 = arith.constant 0 : index
    %40 = vector.load %arg10[%c0_23, %c0_24] : memref<16x256xbf16, #tpu.memory_space<vmem>>, vector<16x256xbf16>
    tpu.vector_store %arg10[%c0_23, %c0_24], %39 {strides = array<i32>} : memref<16x256xbf16, #tpu.memory_space<vmem>>, vector<16x256xbf16>,
    return
  }
  func.func @transform_0(%arg0: i32) -> (i32, i32) {
    %c0_i32 = arith.constant 0 : i32
    %c0_i32_0 = arith.constant 0 : i32
    return %arg0, %c0_i32 : i32, i32
  }
  func.func @transform_1(%arg0: i32) -> (i32, i32) {
    %c0_i32 = arith.constant 0 : i32
    %c0_i32_0 = arith.constant 0 : i32
    %c0_i32_1 = arith.constant 0 : i32
    return %c0_i32, %c0_i32_0 : i32, i32
  }
  func.func @transform_2(%arg0: i32) -> (i32, i32) {
    %c0_i32 = arith.constant 0 : i32
    %c0_i32_0 = arith.constant 0 : i32
    %c0_i32_1 = arith.constant 0 : i32
    return %c0_i32, %c0_i32_0 : i32, i32
  }
  func.func @transform_3(%arg0: i32) -> (i32, i32) {
    %c0_i32 = arith.constant 0 : i32
    %c0_i32_0 = arith.constant 0 : i32
    %c0_i32_1 = arith.constant 0 : i32
    return %c0_i32, %c0_i32_0 : i32, i32
  }
  func.func @transform_4(%arg0: i32) -> (i32, i32) {
    %c0_i32 = arith.constant 0 : i32
    %c0_i32_0 = arith.constant 0 : i32
    %c0_i32_1 = arith.constant 0 : i32
    return %c0_i32, %c0_i32_0 : i32, i32
  }
  func.func @transform_5(%arg0: i32) -> (i32, i32) {
    %c0_i32 = arith.constant 0 : i32
    %c0_i32_0 = arith.constant 0 : i32
    %c0_i32_1 = arith.constant 0 : i32
    return %c0_i32, %c0_i32_0 : i32, i32
  }
  func.func @transform_6(%arg0: i32) -> (i32, i32) {
    %c0_i32 = arith.constant 0 : i32
    %c0_i32_0 = arith.constant 0 : i32
    %c0_i32_1 = arith.constant 0 : i32
    return %c0_i32, %c0_i32_0 : i32, i32
  }
  func.func @transform_7(%arg0: i32) -> (i32, i32) {
    %c0_i32 = arith.constant 0 : i32
    %c0_i32_0 = arith.constant 0 : i32
    %c0_i32_1 = arith.constant 0 : i32
    return %c0_i32, %c0_i32_0 : i32, i32
  }
  func.func @transform_8(%arg0: i32) -> (i32, i32) {
    %c0_i32 = arith.constant 0 : i32
    %c0_i32_0 = arith.constant 0 : i32
    %c0_i32_1 = arith.constant 0 : i32
    return %c0_i32, %c0_i32_0 : i32, i32
  }
  func.func @transform_9(%arg0: i32) -> (i32, i32) {
    %c0_i32 = arith.constant 0 : i32
    %c0_i32_0 = arith.constant 0 : i32
    return %arg0, %c0_i32 : i32, i32
  }
}

</mosaic_0001>

<llo_original>
// kernel: tpu_custom_call.1
$region0: #{tpu_custom_call.1}
  #allocation0 [shape = 'u32[]', space=smem, size = 0x4, offset = 0x4, fixed_abs, tag = 'smem constant byte address 0x4 - core index']
  #allocation1 [shape = 'u32[144,128]{1,0:T(1,128)}', space=vmem, size = 0x12000, scoped, tag = 'internal scratch']
  %s0 = inlined_call_operand.hbm [shape: bf16[16,256], index: 0, kind: input, shape index: {}]
  %s1 = inlined_call_operand.hbm [shape: bf16[256,128], index: 1, kind: input, shape index: {}]
  %s2 = inlined_call_operand.vmem [shape: f32[1,128], index: 2, kind: input, shape index: {}]
  %s3 = inlined_call_operand.hbm [shape: bf16[128,128], index: 3, kind: input, shape index: {}]
  %s4 = inlined_call_operand.vmem [shape: f32[1,128], index: 4, kind: input, shape index: {}]
  %s5 = inlined_call_operand.hbm [shape: bf16[128,128], index: 5, kind: input, shape index: {}]
  %s6 = inlined_call_operand.vmem [shape: f32[1,128], index: 6, kind: input, shape index: {}]
  %s7 = inlined_call_operand.hbm [shape: bf16[128,256], index: 7, kind: input, shape index: {}]
  %s8 = inlined_call_operand.vmem [shape: f32[1,256], index: 8, kind: input, shape index: {}]
  %s9 = inlined_call_operand.hbm [shape: bf16[16,256], index: 9, kind: output, shape index: {}]
  %s10 = sld [smem:[#allocation0]]
  $region66: #{tpu_custom_call.1} parent=0
    _
  %s12 = ssub.s32 1, %s10
  %s13 = scalar_select 0, %s12, %s10
  $region1: #{tpu_custom_call.1} parent=0
    #allocation2 [shape = 'u8[8192]{0}', space=vmem, size = 0x2000, scoped, tag = 'input window, operand 0, single buffered']
    #allocation3 [shape = 's32[1]{0}', space=sflag, size = 0x4, scoped, tag = 'scoped memory for tpu_custom_call.1']
    #allocation4 [shape = 's32[1]{0}', space=sflag, size = 0x4, scoped, tag = 'scoped memory for tpu_custom_call.1']
    #allocation5 [shape = 'u8[65536]{0}', space=vmem, size = 0x10000, scoped, tag = 'input window, operand 1, single buffered']
    #allocation6 [shape = 's32[1]{0}', space=sflag, size = 0x4, scoped, tag = 'scoped memory for tpu_custom_call.1']
    #allocation7 [shape = 'u8[32768]{0}', space=vmem, size = 0x8000, scoped, tag = 'input window, operand 3, single buffered']
    #allocation8 [shape = 'u8[32768]{0}', space=vmem, size = 0x8000, scoped, tag = 'input window, operand 5, single buffered']
    #allocation9 [shape = 's32[1]{0}', space=sflag, size = 0x4, scoped, tag = 'scoped memory for tpu_custom_call.1']
    #allocation10 [shape = 'u8[65536]{0}', space=vmem, size = 0x10000, scoped, tag = 'input window, operand 7, single buffered']
    #allocation11 [shape = 'u8[8192]{0}', space=vmem, size = 0x2000, scoped, tag = 'output window, operand 0, single buffered']
    %14 = vsyncpa [#allocation3], 0
    %15 = vsyncpa [#allocation6], 0
    %16 = vsyncpa [#allocation9], 0
    %17 = vsyncpa [#allocation4], 0
    // Predicated region
    $region2: #{tpu_custom_call.1} parent=1 // pred_check
      _
    $region3: #{tpu_custom_call.1} parent=1 // pred_check_branch
      %19 = sbr.rel (0) target = $region5
    $region4: #{tpu_custom_call.1} parent=1 // pred_region
      %s21 = ssub.s32 256, 256
      %22 = vsyncadd [#allocation3], %s21
      %s23 = sshll.u32 [#allocation2], 4
      %s24 = int_to_ptr.vmem [resolvable:$true] %s23
      %29 = dma.hbm_to_vmem [thread:$0]  %s0, 256, %s24, [#allocation3], 128, 128, 8
    $region5: #{tpu_custom_call.1} parent=1 // pred_fallthru
      _
    // Predicated region
    $region6: #{tpu_custom_call.1} parent=1 // pred_check
      _
    $region7: #{tpu_custom_call.1} parent=1 // pred_check_branch
      %31 = sbr.rel (0) target = $region9
    $region8: #{tpu_custom_call.1} parent=1 // pred_region
      %s33 = ssub.s32 2048, 2048
      %34 = vsyncadd [#allocation6], %s33
      %s35 = sshll.u32 [#allocation5], 4
      %s36 = int_to_ptr.vmem [resolvable:$true] %s35
      %41 = dma.hbm_to_vmem [thread:$0]  %s1, 2048, %s36, [#allocation6], 64, 64, 4
    $region9: #{tpu_custom_call.1} parent=1 // pred_fallthru
      _
    // Predicated region
    $region10: #{tpu_custom_call.1} parent=1 // pred_check
      _
    $region11: #{tpu_custom_call.1} parent=1 // pred_check_branch
      %43 = sbr.rel (0) target = $region13
    $region12: #{tpu_custom_call.1} parent=1 // pred_region
      _
    $region13: #{tpu_custom_call.1} parent=1 // pred_fallthru
      _
    // Predicated region
    $region14: #{tpu_custom_call.1} parent=1 // pred_check
      _
    $region15: #{tpu_custom_call.1} parent=1 // pred_check_branch
      %45 = sbr.rel (0) target = $region17
    $region16: #{tpu_custom_call.1} parent=1 // pred_region
      %s47 = ssub.s32 1024, 1024
      %48 = vsyncadd [#allocation6], %s47
      %s49 = sshll.u32 [#allocation7], 4
      %s50 = int_to_ptr.vmem [resolvable:$true] %s49
      %55 = dma.hbm_to_vmem [thread:$0]  %s3, 1024, %s50, [#allocation6], 64, 64, 4
    $region17: #{tpu_custom_call.1} parent=1 // pred_fallthru
      _
    // Predicated region
    $region18: #{tpu_custom_call.1} parent=1 // pred_check
      _
    $region19: #{tpu_custom_call.1} parent=1 // pred_check_branch
      %57 = sbr.rel (0) target = $region21
    $region20: #{tpu_custom_call.1} parent=1 // pred_region
      _
    $region21: #{tpu_custom_call.1} parent=1 // pred_fallthru
      _
    // Predicated region
    $region22: #{tpu_custom_call.1} parent=1 // pred_check
      _
    $region23: #{tpu_custom_call.1} parent=1 // pred_check_branch
      %59 = sbr.rel (0) target = $region25
    $region24: #{tpu_custom_call.1} parent=1 // pred_region
      %s61 = ssub.s32 1024, 1024
      %62 = vsyncadd [#allocation9], %s61
      %s63 = sshll.u32 [#allocation8], 4
      %s64 = int_to_ptr.vmem [resolvable:$true] %s63
      %69 = dma.hbm_to_vmem [thread:$0]  %s5, 1024, %s64, [#allocation9], 64, 64, 4
    $region25: #{tpu_custom_call.1} parent=1 // pred_fallthru
      _
    // Predicated region
    $region26: #{tpu_custom_call.1} parent=1 // pred_check
      _
    $region27: #{tpu_custom_call.1} parent=1 // pred_check_branch
      %71 = sbr.rel (0) target = $region29
    $region28: #{tpu_custom_call.1} parent=1 // pred_region
      _
    $region29: #{tpu_custom_call.1} parent=1 // pred_fallthru
      _
    // Predicated region
    $region30: #{tpu_custom_call.1} parent=1 // pred_check
      _
    $region31: #{tpu_custom_call.1} parent=1 // pred_check_branch
      %73 = sbr.rel (0) target = $region33
    $region32: #{tpu_custom_call.1} parent=1 // pred_region
      %s75 = ssub.s32 2048, 2048
      %76 = vsyncadd [#allocation9], %s75
      %s77 = sshll.u32 [#allocation10], 4
      %s78 = int_to_ptr.vmem [resolvable:$true] %s77
      %83 = dma.hbm_to_vmem [thread:$0]  %s7, 2048, %s78, [#allocation9], 128, 128, 8
    $region33: #{tpu_custom_call.1} parent=1 // pred_fallthru
      _
    // Predicated region
    $region34: #{tpu_custom_call.1} parent=1 // pred_check
      _
    $region35: #{tpu_custom_call.1} parent=1 // pred_check_branch
      %85 = sbr.rel (0) target = $region37
    $region36: #{tpu_custom_call.1} parent=1 // pred_region
      _
    $region37: #{tpu_custom_call.1} parent=1 // pred_fallthru
      _
    // Predicated region
    $region38: #{tpu_custom_call.1} parent=1 // pred_check
      _
    $region39: #{tpu_custom_call.1} parent=1 // pred_check_branch
      %87 = sbr.rel (0) target = $region41
    $region40: #{tpu_custom_call.1} parent=1 // pred_region
      %88 = dma.done [#allocation3], 256
    $region41: #{tpu_custom_call.1} parent=1 // pred_fallthru
      _
    // Predicated region
    $region42: #{tpu_custom_call.1} parent=1 // pred_check
      _
    $region43: #{tpu_custom_call.1} parent=1 // pred_check_branch
      %90 = sbr.rel (0) target = $region45
    $region44: #{tpu_custom_call.1} parent=1 // pred_region
      %91 = dma.done [#allocation6], 2048
    $region45: #{tpu_custom_call.1} parent=1 // pred_fallthru
      _
    // Predicated region
    $region46: #{tpu_custom_call.1} parent=1 // pred_check
      _
    $region47: #{tpu_custom_call.1} parent=1 // pred_check_branch
      %93 = sbr.rel (0) target = $region49
    $region48: #{tpu_custom_call.1} parent=1 // pred_region
      %94 = dma.done [#allocation6], 1024
    $region49: #{tpu_custom_call.1} parent=1 // pred_fallthru
      _
    // Predicated region
    $region50: #{tpu_custom_call.1} parent=1 // pred_check
      _
    $region51: #{tpu_custom_call.1} parent=1 // pred_check_branch
      %96 = sbr.rel (0) target = $region53
    $region52: #{tpu_custom_call.1} parent=1 // pred_region
      %97 = dma.done [#allocation9], 1024
    $region53: #{tpu_custom_call.1} parent=1 // pred_fallthru
      _
    // Predicated region
    $region54: #{tpu_custom_call.1} parent=1 // pred_check
      _
    $region55: #{tpu_custom_call.1} parent=1 // pred_check_branch
      %99 = sbr.rel (0) target = $region57
    $region56: #{tpu_custom_call.1} parent=1 // pred_region
      %100 = dma.done [#allocation9], 2048
    $region57: #{tpu_custom_call.1} parent=1 // pred_fallthru
      _
    %v102 = vld [vmem:[#allocation2] sm:$0xff]
    %v103 = vld [vmem:[#allocation2 + $0x8] sm:$0xff]
    %v104 = vld [vmem:[#allocation5] sm:$0xf]
    %v105 = vld [vmem:[#allocation5 + $0x4] sm:$0xf]
    %v106 = vld [vmem:[#allocation5 + $0x8] sm:$0xf]
    %v107 = vld [vmem:[#allocation5 + $0xc] sm:$0xf]
    %v108 = vld [vmem:[#allocation5 + $0x10] sm:$0xf]
    %v109 = vld [vmem:[#allocation5 + $0x14] sm:$0xf]
    %v110 = vld [vmem:[#allocation5 + $0x18] sm:$0xf]
    %v111 = vld [vmem:[#allocation5 + $0x1c] sm:$0xf]
    %v112 = vld [vmem:[#allocation5 + $0x20] sm:$0xf]
    %v113 = vld [vmem:[#allocation5 + $0x24] sm:$0xf]
    %v114 = vld [vmem:[#allocation5 + $0x28] sm:$0xf]
    %v115 = vld [vmem:[#allocation5 + $0x2c] sm:$0xf]
    %v116 = vld [vmem:[#allocation5 + $0x30] sm:$0xf]
    %v117 = vld [vmem:[#allocation5 + $0x34] sm:$0xf]
    %v118 = vld [vmem:[#allocation5 + $0x38] sm:$0xf]
    %v119 = vld [vmem:[#allocation5 + $0x3c] sm:$0xf]
    %v120 = vld [vmem:[#allocation5 + $0x40] sm:$0xf]
    %v121 = vld [vmem:[#allocation5 + $0x44] sm:$0xf]
    %v122 = vld [vmem:[#allocation5 + $0x48] sm:$0xf]
    %v123 = vld [vmem:[#allocation5 + $0x4c] sm:$0xf]
    %v124 = vld [vmem:[#allocation5 + $0x50] sm:$0xf]
    %v125 = vld [vmem:[#allocation5 + $0x54] sm:$0xf]
    %v126 = vld [vmem:[#allocation5 + $0x58] sm:$0xf]
    %v127 = vld [vmem:[#allocation5 + $0x5c] sm:$0xf]
    %v128 = vld [vmem:[#allocation5 + $0x60] sm:$0xf]
    %v129 = vld [vmem:[#allocation5 + $0x64] sm:$0xf]
    %v130 = vld [vmem:[#allocation5 + $0x68] sm:$0xf]
    %v131 = vld [vmem:[#allocation5 + $0x6c] sm:$0xf]
    %v132 = vld [vmem:[#allocation5 + $0x70] sm:$0xf]
    %v133 = vld [vmem:[#allocation5 + $0x74] sm:$0xf]
    %v134 = vld [vmem:[#allocation5 + $0x78] sm:$0xf]
    %v135 = vld [vmem:[#allocation5 + $0x7c] sm:$0xf]
    %v136 = vld [vmem:[%s2] sm:$0x1]
    %v138 = vlaneseq
    %v139 = vshrl.u32 %v138, 7
    %v140 = vsub.s32 0, %v139
    %v141 = vrot.slane %v136, %v140
    %v145 = vunpack.c.l.b16 %v102
    %v146 = vunpack.c.h.b16 %v102
    %v147 = vunpack.c.l.b16 %v103
    %v148 = vunpack.c.h.b16 %v103
    %v149 = vpack.c.b16 %v147, %v145
    %v150 = vpack.c.b16 %v148, %v146
    %v185 = vunpack.c.l.b16 %v104
    %v186 = vunpack.c.l.b16 %v105
    %v187 = vunpack.c.l.b16 %v106
    %v188 = vunpack.c.l.b16 %v107
    %v189 = vunpack.c.l.b16 %v108
    %v190 = vunpack.c.l.b16 %v109
    %v191 = vunpack.c.l.b16 %v110
    %v192 = vunpack.c.l.b16 %v111
    %v193 = vunpack.c.l.b16 %v112
    %v194 = vunpack.c.l.b16 %v113
    %v195 = vunpack.c.l.b16 %v114
    %v196 = vunpack.c.l.b16 %v115
    %v197 = vunpack.c.l.b16 %v116
    %v198 = vunpack.c.l.b16 %v117
    %v199 = vunpack.c.l.b16 %v118
    %v200 = vunpack.c.l.b16 %v119
    %v201 = vunpack.c.l.b16 %v120
    %v202 = vunpack.c.l.b16 %v121
    %v203 = vunpack.c.l.b16 %v122
    %v204 = vunpack.c.l.b16 %v123
    %v205 = vunpack.c.l.b16 %v124
    %v206 = vunpack.c.l.b16 %v125
    %v207 = vunpack.c.l.b16 %v126
    %v208 = vunpack.c.l.b16 %v127
    %v209 = vunpack.c.l.b16 %v128
    %v210 = vunpack.c.l.b16 %v129
    %v211 = vunpack.c.l.b16 %v130
    %v212 = vunpack.c.l.b16 %v131
    %v213 = vunpack.c.l.b16 %v132
    %v214 = vunpack.c.l.b16 %v133
    %v215 = vunpack.c.l.b16 %v134
    %v216 = vunpack.c.l.b16 %v135
    %v217 = vpack.c.b16 %v186, %v185
    %v218 = vpack.c.b16 %v188, %v187
    %v219 = vpack.c.b16 %v190, %v189
    %v220 = vpack.c.b16 %v192, %v191
    %v221 = vpack.c.b16 %v194, %v193
    %v222 = vpack.c.b16 %v196, %v195
    %v223 = vpack.c.b16 %v198, %v197
    %v224 = vpack.c.b16 %v200, %v199
    %v225 = vpack.c.b16 %v202, %v201
    %v226 = vpack.c.b16 %v204, %v203
    %v227 = vpack.c.b16 %v206, %v205
    %v228 = vpack.c.b16 %v208, %v207
    %v229 = vpack.c.b16 %v210, %v209
    %v230 = vpack.c.b16 %v212, %v211
    %v231 = vpack.c.b16 %v214, %v213
    %v232 = vpack.c.b16 %v216, %v215
    %249 = vmatprep.subr.bf16.mxu0 0
    %250 = vmatpush1.bf16.msra.mxu0 %v224
    %251 = vmatprep.subr.bf16.mxu0 0
    %252 = vmatpush1.bf16.msra.mxu0 %v223
    %253 = vmatprep.subr.bf16.mxu0 0
    %254 = vmatpush1.bf16.msra.mxu0 %v222
    %255 = vmatprep.subr.bf16.mxu0 0
    %256 = vmatpush1.bf16.msra.mxu0 %v221
    %257 = vmatprep.subr.bf16.mxu0 0
    %258 = vmatpush1.bf16.msra.mxu0 %v220
    %259 = vmatprep.subr.bf16.mxu0 0
    %260 = vmatpush1.bf16.msra.mxu0 %v219
    %261 = vmatprep.subr.bf16.mxu0 0
    %262 = vmatpush1.bf16.msra.mxu0 %v218
    %263 = vmatprep.subr.bf16.mxu0 0
    %264 = vmatpush1.bf16.msra.mxu0 %v217
    %265 = vmatprep.subr.bf16.mxu0 0
    %266 = vmatpush2.bf16.msra.mxu0 %v232
    %267 = vmatprep.subr.bf16.mxu0 0
    %268 = vmatpush2.bf16.msra.mxu0 %v231
    %269 = vmatprep.subr.bf16.mxu0 0
    %270 = vmatpush2.bf16.msra.mxu0 %v230
    %271 = vmatprep.subr.bf16.mxu0 0
    %272 = vmatpush2.bf16.msra.mxu0 %v229
    %273 = vmatprep.subr.bf16.mxu0 0
    %274 = vmatpush2.bf16.msra.mxu0 %v228
    %275 = vmatprep.subr.bf16.mxu0 0
    %276 = vmatpush2.bf16.msra.mxu0 %v227
    %277 = vmatprep.subr.bf16.mxu0 0
    %278 = vmatpush2.bf16.msra.mxu0 %v226
    %279 = vmatprep.subr.bf16.mxu0 0
    %280 = vmatpush2.bf16.msra.mxu0 %v225
    %281 = vmatprep.mubr.bf16.mxu0 %v150
    %282 = vmatmul.mubr.bf16.gmra.mxu0 %v149
    %v283 = vpop.f32.mrf.mxu0
    %v284 = vadd.f32 %v141, %v283
    %v285 = vpop.f32.mrf.mxu0
    %v286 = vpop.f32.mrf.mxu0
    %v287 = vadd.f32 %v141, %v286
    %v288 = vpop.f32.mrf.mxu0
    %289 = vdwg.mxu0
    %v290 = vxor.u32 %v284, 2147483648
    %v291 = vxor.u32 %v287, 2147483648
    %v292 = vmul.f32 %v290, 1.442695
    %v293 = vpow.pop %v292
    %v294 = vmul.f32 %v291, 1.442695
    %v295 = vpow.pop %v294
    %v296 = vadd.f32 %v293, 1.0
    %v297 = vadd.f32 %v295, 1.0
    %v298 = vrcp.pop %v296
    %v299 = vmul.f32 1.0, %v298
    %v300 = vrcp.pop %v297
    %v301 = vmul.f32 1.0, %v300
    %v302 = vpack.c.bf16 %v301, %v299
    %v303 = vld [vmem:[#allocation7] sm:$0xf]
    %v304 = vld [vmem:[#allocation7 + $0x4] sm:$0xf]
    %v305 = vld [vmem:[#allocation7 + $0x8] sm:$0xf]
    %v306 = vld [vmem:[#allocation7 + $0xc] sm:$0xf]
    %v307 = vld [vmem:[#allocation7 + $0x10] sm:$0xf]
    %v308 = vld [vmem:[#allocation7 + $0x14] sm:$0xf]
    %v309 = vld [vmem:[#allocation7 + $0x18] sm:$0xf]
    %v310 = vld [vmem:[#allocation7 + $0x1c] sm:$0xf]
    %v311 = vld [vmem:[#allocation7 + $0x20] sm:$0xf]
    %v312 = vld [vmem:[#allocation7 + $0x24] sm:$0xf]
    %v313 = vld [vmem:[#allocation7 + $0x28] sm:$0xf]
    %v314 = vld [vmem:[#allocation7 + $0x2c] sm:$0xf]
    %v315 = vld [vmem:[#allocation7 + $0x30] sm:$0xf]
    %v316 = vld [vmem:[#allocation7 + $0x34] sm:$0xf]
    %v317 = vld [vmem:[#allocation7 + $0x38] sm:$0xf]
    %v318 = vld [vmem:[#allocation7 + $0x3c] sm:$0xf]
    %v319 = vld [vmem:[%s4] sm:$0x1]
    %v321 = vlaneseq
    %v322 = vshrl.u32 %v321, 7
    %v323 = vsub.s32 0, %v322
    %v324 = vrot.slane %v319, %v323
    %v342 = vunpack.c.l.b16 %v303
    %v343 = vunpack.c.l.b16 %v304
    %v344 = vunpack.c.l.b16 %v305
    %v345 = vunpack.c.l.b16 %v306
    %v346 = vunpack.c.l.b16 %v307
    %v347 = vunpack.c.l.b16 %v308
    %v348 = vunpack.c.l.b16 %v309
    %v349 = vunpack.c.l.b16 %v310
    %v350 = vunpack.c.l.b16 %v311
    %v351 = vunpack.c.l.b16 %v312
    %v352 = vunpack.c.l.b16 %v313
    %v353 = vunpack.c.l.b16 %v314
    %v354 = vunpack.c.l.b16 %v315
    %v355 = vunpack.c.l.b16 %v316
    %v356 = vunpack.c.l.b16 %v317
    %v357 = vunpack.c.l.b16 %v318
    %v358 = vpack.c.b16 %v343, %v342
    %v359 = vpack.c.b16 %v345, %v344
    %v360 = vpack.c.b16 %v347, %v346
    %v361 = vpack.c.b16 %v349, %v348
    %v362 = vpack.c.b16 %v351, %v350
    %v363 = vpack.c.b16 %v353, %v352
    %v364 = vpack.c.b16 %v355, %v354
    %v365 = vpack.c.b16 %v357, %v356
    %374 = vmatprep.subr.bf16.mxu0 0
    %375 = vmatpush1.bf16.msra.mxu0 %v365
    %376 = vmatprep.subr.bf16.mxu0 0
    %377 = vmatpush1.bf16.msra.mxu0 %v364
    %378 = vmatprep.subr.bf16.mxu0 0
    %379 = vmatpush1.bf16.msra.mxu0 %v363
    %380 = vmatprep.subr.bf16.mxu0 0
    %381 = vmatpush1.bf16.msra.mxu0 %v362
    %382 = vmatprep.subr.bf16.mxu0 0
    %383 = vmatpush1.bf16.msra.mxu0 %v361
    %384 = vmatprep.subr.bf16.mxu0 0
    %385 = vmatpush1.bf16.msra.mxu0 %v360
    %386 = vmatprep.subr.bf16.mxu0 0
    %387 = vmatpush1.bf16.msra.mxu0 %v359
    %388 = vmatprep.subr.bf16.mxu0 0
    %389 = vmatpush1.bf16.msra.mxu0 %v358
    %390 = vmatprep.subr.bf16.mxu0 0
    %391 = vmatpush2.bf16.msra.mxu0 0
    %392 = vmatprep.subr.bf16.mxu0 0
    %393 = vmatpush2.bf16.msra.mxu0 0
    %394 = vmatprep.subr.bf16.mxu0 0
    %395 = vmatpush2.bf16.msra.mxu0 0
    %396 = vmatprep.subr.bf16.mxu0 0
    %397 = vmatpush2.bf16.msra.mxu0 0
    %398 = vmatprep.subr.bf16.mxu0 0
    %399 = vmatpush2.bf16.msra.mxu0 0
    %400 = vmatprep.subr.bf16.mxu0 0
    %401 = vmatpush2.bf16.msra.mxu0 0
    %402 = vmatprep.subr.bf16.mxu0 0
    %403 = vmatpush2.bf16.msra.mxu0 0
    %404 = vmatprep.subr.bf16.mxu0 0
    %405 = vmatpush2.bf16.msra.mxu0 0
    %406 = vmatprep.mubr.bf16.mxu0 0
    %407 = vmatmul.mubr.bf16.gmra.mxu0 %v302
    %v408 = vpop.f32.mrf.mxu0
    %v409 = vadd.f32 %v324, %v408
    %v410 = vpop.f32.mrf.mxu0
    %v411 = vpop.f32.mrf.mxu0
    %v412 = vadd.f32 %v324, %v411
    %v413 = vpop.f32.mrf.mxu0
    %414 = vdwg.mxu0
    %v415 = vxor.u32 %v409, 2147483648
    %v416 = vxor.u32 %v412, 2147483648
    %v417 = vmul.f32 %v415, 1.442695
    %v418 = vpow.pop %v417
    %v419 = vmul.f32 %v416, 1.442695
    %v420 = vpow.pop %v419
    %v421 = vadd.f32 %v418, 1.0
    %v422 = vadd.f32 %v420, 1.0
    %v423 = vrcp.pop %v421
    %v424 = vmul.f32 1.0, %v423
    %v425 = vrcp.pop %v422
    %v426 = vmul.f32 1.0, %v425
    %v427 = vpack.c.bf16 %v426, %v424
    %v428 = vld [vmem:[#allocation8] sm:$0xf]
    %v429 = vld [vmem:[#allocation8 + $0x4] sm:$0xf]
    %v430 = vld [vmem:[#allocation8 + $0x8] sm:$0xf]
    %v431 = vld [vmem:[#allocation8 + $0xc] sm:$0xf]
    %v432 = vld [vmem:[#allocation8 + $0x10] sm:$0xf]
    %v433 = vld [vmem:[#allocation8 + $0x14] sm:$0xf]
    %v434 = vld [vmem:[#allocation8 + $0x18] sm:$0xf]
    %v435 = vld [vmem:[#allocation8 + $0x1c] sm:$0xf]
    %v436 = vld [vmem:[#allocation8 + $0x20] sm:$0xf]
    %v437 = vld [vmem:[#allocation8 + $0x24] sm:$0xf]
    %v438 = vld [vmem:[#allocation8 + $0x28] sm:$0xf]
    %v439 = vld [vmem:[#allocation8 + $0x2c] sm:$0xf]
    %v440 = vld [vmem:[#allocation8 + $0x30] sm:$0xf]
    %v441 = vld [vmem:[#allocation8 + $0x34] sm:$0xf]
    %v442 = vld [vmem:[#allocation8 + $0x38] sm:$0xf]
    %v443 = vld [vmem:[#allocation8 + $0x3c] sm:$0xf]
    %v444 = vld [vmem:[%s6] sm:$0x1]
    %v446 = vlaneseq
    %v447 = vshrl.u32 %v446, 7
    %v448 = vsub.s32 0, %v447
    %v449 = vrot.slane %v444, %v448
    %v467 = vunpack.c.l.b16 %v428
    %v468 = vunpack.c.l.b16 %v429
    %v469 = vunpack.c.l.b16 %v430
    %v470 = vunpack.c.l.b16 %v431
    %v471 = vunpack.c.l.b16 %v432
    %v472 = vunpack.c.l.b16 %v433
    %v473 = vunpack.c.l.b16 %v434
    %v474 = vunpack.c.l.b16 %v435
    %v475 = vunpack.c.l.b16 %v436
    %v476 = vunpack.c.l.b16 %v437
    %v477 = vunpack.c.l.b16 %v438
    %v478 = vunpack.c.l.b16 %v439
    %v479 = vunpack.c.l.b16 %v440
    %v480 = vunpack.c.l.b16 %v441
    %v481 = vunpack.c.l.b16 %v442
    %v482 = vunpack.c.l.b16 %v443
    %v483 = vpack.c.b16 %v468, %v467
    %v484 = vpack.c.b16 %v470, %v469
    %v485 = vpack.c.b16 %v472, %v471
    %v486 = vpack.c.b16 %v474, %v473
    %v487 = vpack.c.b16 %v476, %v475
    %v488 = vpack.c.b16 %v478, %v477
    %v489 = vpack.c.b16 %v480, %v479
    %v490 = vpack.c.b16 %v482, %v481
    %499 = vmatprep.subr.bf16.mxu0 0
    %500 = vmatpush1.bf16.msra.mxu0 %v490
    %501 = vmatprep.subr.bf16.mxu0 0
    %502 = vmatpush1.bf16.msra.mxu0 %v489
    %503 = vmatprep.subr.bf16.mxu0 0
    %504 = vmatpush1.bf16.msra.mxu0 %v488
    %505 = vmatprep.subr.bf16.mxu0 0
    %506 = vmatpush1.bf16.msra.mxu0 %v487
    %507 = vmatprep.subr.bf16.mxu0 0
    %508 = vmatpush1.bf16.msra.mxu0 %v486
    %509 = vmatprep.subr.bf16.mxu0 0
    %510 = vmatpush1.bf16.msra.mxu0 %v485
    %511 = vmatprep.subr.bf16.mxu0 0
    %512 = vmatpush1.bf16.msra.mxu0 %v484
    %513 = vmatprep.subr.bf16.mxu0 0
    %514 = vmatpush1.bf16.msra.mxu0 %v483
    %515 = vmatprep.subr.bf16.mxu0 0
    %516 = vmatpush2.bf16.msra.mxu0 0
    %517 = vmatprep.subr.bf16.mxu0 0
    %518 = vmatpush2.bf16.msra.mxu0 0
    %519 = vmatprep.subr.bf16.mxu0 0
    %520 = vmatpush2.bf16.msra.mxu0 0
    %521 = vmatprep.subr.bf16.mxu0 0
    %522 = vmatpush2.bf16.msra.mxu0 0
    %523 = vmatprep.subr.bf16.mxu0 0
    %524 = vmatpush2.bf16.msra.mxu0 0
    %525 = vmatprep.subr.bf16.mxu0 0
    %526 = vmatpush2.bf16.msra.mxu0 0
    %527 = vmatprep.subr.bf16.mxu0 0
    %528 = vmatpush2.bf16.msra.mxu0 0
    %529 = vmatprep.subr.bf16.mxu0 0
    %530 = vmatpush2.bf16.msra.mxu0 0
    %531 = vmatprep.mubr.bf16.mxu0 0
    %532 = vmatmul.mubr.bf16.gmra.mxu0 %v427
    %v533 = vpop.f32.mrf.mxu0
    %v534 = vadd.f32 %v449, %v533
    %v535 = vpop.f32.mrf.mxu0
    %v536 = vpop.f32.mrf.mxu0
    %v537 = vadd.f32 %v449, %v536
    %v538 = vpop.f32.mrf.mxu0
    %539 = vdwg.mxu0
    %v540 = vxor.u32 %v534, 2147483648
    %v541 = vxor.u32 %v537, 2147483648
    %v542 = vmul.f32 %v540, 1.442695
    %v543 = vpow.pop %v542
    %v544 = vmul.f32 %v541, 1.442695
    %v545 = vpow.pop %v544
    %v546 = vadd.f32 %v543, 1.0
    %v547 = vadd.f32 %v545, 1.0
    %v548 = vrcp.pop %v546
    %v549 = vmul.f32 1.0, %v548
    %v550 = vrcp.pop %v547
    %v551 = vmul.f32 1.0, %v550
    %v552 = vpack.c.bf16 %v551, %v549
    %v553 = vld [vmem:[#allocation10] sm:$0xff]
    %v554 = vld [vmem:[#allocation10 + $0x8] sm:$0xff]
    %v555 = vld [vmem:[#allocation10 + $0x10] sm:$0xff]
    %v556 = vld [vmem:[#allocation10 + $0x18] sm:$0xff]
    %v557 = vld [vmem:[#allocation10 + $0x20] sm:$0xff]
    %v558 = vld [vmem:[#allocation10 + $0x28] sm:$0xff]
    %v559 = vld [vmem:[#allocation10 + $0x30] sm:$0xff]
    %v560 = vld [vmem:[#allocation10 + $0x38] sm:$0xff]
    %v561 = vld [vmem:[#allocation10 + $0x40] sm:$0xff]
    %v562 = vld [vmem:[#allocation10 + $0x48] sm:$0xff]
    %v563 = vld [vmem:[#allocation10 + $0x50] sm:$0xff]
    %v564 = vld [vmem:[#allocation10 + $0x58] sm:$0xff]
    %v565 = vld [vmem:[#allocation10 + $0x60] sm:$0xff]
    %v566 = vld [vmem:[#allocation10 + $0x68] sm:$0xff]
    %v567 = vld [vmem:[#allocation10 + $0x70] sm:$0xff]
    %v568 = vld [vmem:[#allocation10 + $0x78] sm:$0xff]
    %v569 = vld [vmem:[%s8] sm:$0x3]
    %v571 = vlaneseq
    %v572 = vshrl.u32 %v571, 7
    %v573 = vsub.s32 0, %v572
    %v574 = vrot.slane %v569, %v573
    %v575 = vlaneseq
    %v576 = vshrl.u32 %v575, 7
    %v577 = vsub.s32 1, %v576
    %v578 = vrot.slane %v569, %v577
    %v597 = vunpack.c.l.b16 %v553
    %v598 = vunpack.c.h.b16 %v553
    %v599 = vunpack.c.l.b16 %v554
    %v600 = vunpack.c.h.b16 %v554
    %v601 = vunpack.c.l.b16 %v555
    %v602 = vunpack.c.h.b16 %v555
    %v603 = vunpack.c.l.b16 %v556
    %v604 = vunpack.c.h.b16 %v556
    %v605 = vunpack.c.l.b16 %v557
    %v606 = vunpack.c.h.b16 %v557
    %v607 = vunpack.c.l.b16 %v558
    %v608 = vunpack.c.h.b16 %v558
    %v609 = vunpack.c.l.b16 %v559
    %v610 = vunpack.c.h.b16 %v559
    %v611 = vunpack.c.l.b16 %v560
    %v612 = vunpack.c.h.b16 %v560
    %v613 = vunpack.c.l.b16 %v561
    %v614 = vunpack.c.h.b16 %v561
    %v615 = vunpack.c.l.b16 %v562
    %v616 = vunpack.c.h.b16 %v562
    %v617 = vunpack.c.l.b16 %v563
    %v618 = vunpack.c.h.b16 %v563
    %v619 = vunpack.c.l.b16 %v564
    %v620 = vunpack.c.h.b16 %v564
    %v621 = vunpack.c.l.b16 %v565
    %v622 = vunpack.c.h.b16 %v565
    %v623 = vunpack.c.l.b16 %v566
    %v624 = vunpack.c.h.b16 %v566
    %v625 = vunpack.c.l.b16 %v567
    %v626 = vunpack.c.h.b16 %v567
    %v627 = vunpack.c.l.b16 %v568
    %v628 = vunpack.c.h.b16 %v568
    %v629 = vpack.c.b16 %v599, %v597
    %v630 = vpack.c.b16 %v600, %v598
    %v631 = vpack.c.b16 %v603, %v601
    %v632 = vpack.c.b16 %v604, %v602
    %v633 = vpack.c.b16 %v607, %v605
    %v634 = vpack.c.b16 %v608, %v606
    %v635 = vpack.c.b16 %v611, %v609
    %v636 = vpack.c.b16 %v612, %v610
    %v637 = vpack.c.b16 %v615, %v613
    %v638 = vpack.c.b16 %v616, %v614
    %v639 = vpack.c.b16 %v619, %v617
    %v640 = vpack.c.b16 %v620, %v618
    %v641 = vpack.c.b16 %v623, %v621
    %v642 = vpack.c.b16 %v624, %v622
    %v643 = vpack.c.b16 %v627, %v625
    %v644 = vpack.c.b16 %v628, %v626
    %661 = vmatprep.subr.bf16.mxu0 %v644
    %662 = vmatpush1.bf16.msra.mxu0 %v643
    %663 = vmatprep.subr.bf16.mxu0 %v642
    %664 = vmatpush1.bf16.msra.mxu0 %v641
    %665 = vmatprep.subr.bf16.mxu0 %v640
    %666 = vmatpush1.bf16.msra.mxu0 %v639
    %667 = vmatprep.subr.bf16.mxu0 %v638
    %668 = vmatpush1.bf16.msra.mxu0 %v637
    %669 = vmatprep.subr.bf16.mxu0 %v636
    %670 = vmatpush1.bf16.msra.mxu0 %v635
    %671 = vmatprep.subr.bf16.mxu0 %v634
    %672 = vmatpush1.bf16.msra.mxu0 %v633
    %673 = vmatprep.subr.bf16.mxu0 %v632
    %674 = vmatpush1.bf16.msra.mxu0 %v631
    %675 = vmatprep.subr.bf16.mxu0 %v630
    %676 = vmatpush1.bf16.msra.mxu0 %v629
    %677 = vmatprep.subr.bf16.mxu0 0
    %678 = vmatpush2.bf16.msra.mxu0 0
    %679 = vmatprep.subr.bf16.mxu0 0
    %680 = vmatpush2.bf16.msra.mxu0 0
    %681 = vmatprep.subr.bf16.mxu0 0
    %682 = vmatpush2.bf16.msra.mxu0 0
    %683 = vmatprep.subr.bf16.mxu0 0
    %684 = vmatpush2.bf16.msra.mxu0 0
    %685 = vmatprep.subr.bf16.mxu0 0
    %686 = vmatpush2.bf16.msra.mxu0 0
    %687 = vmatprep.subr.bf16.mxu0 0
    %688 = vmatpush2.bf16.msra.mxu0 0
    %689 = vmatprep.subr.bf16.mxu0 0
    %690 = vmatpush2.bf16.msra.mxu0 0
    %691 = vmatprep.subr.bf16.mxu0 0
    %692 = vmatpush2.bf16.msra.mxu0 0
    %693 = vmatprep.mubr.bf16.mxu0 0
    %694 = vmatmul.mubr.bf16.gmra.mxu0 %v552
    %v695 = vpop.f32.mrf.mxu0
    %v696 = vadd.f32 %v574, %v695
    %v697 = vpop.f32.mrf.mxu0
    %v698 = vadd.f32 %v578, %v697
    %v699 = vpop.f32.mrf.mxu0
    %v700 = vadd.f32 %v574, %v699
    %v701 = vpop.f32.mrf.mxu0
    %v702 = vadd.f32 %v578, %v701
    %703 = vdwg.mxu0
    %v704 = vpack.c.bf16 %v700, %v696
    %v705 = vpack.c.bf16 %v702, %v698
    %v708 = vunpack.c.l.b16 %v704
    %v709 = vunpack.c.l.b16 %v705
    %v710 = vunpack.c.h.b16 %v704
    %v711 = vunpack.c.h.b16 %v705
    %v712 = vpack.c.b16 %v709, %v708
    %v713 = vpack.c.b16 %v711, %v710
    %716 = vst [vmem:[#allocation11] sm:$0xff] %v712
    %717 = vst [vmem:[#allocation11 + $0x8] sm:$0xff] %v713
    // Predicated region
    $region58: #{tpu_custom_call.1} parent=1 // pred_check
      _
    $region59: #{tpu_custom_call.1} parent=1 // pred_check_branch
      %719 = sbr.rel (0) target = $region61
    $region60: #{tpu_custom_call.1} parent=1 // pred_region
      %s721 = ssub.s32 256, 256
      %722 = vsyncadd [#allocation4], %s721
      %s723 = sshll.u32 [#allocation11], 4
      %s724 = int_to_ptr.vmem [resolvable:$true] %s723
      %729 = dma.vmem_to_hbm [thread:$0]  %s724, 256, %s9, [#allocation4], 128, 128, 8
    $region61: #{tpu_custom_call.1} parent=1 // pred_fallthru
      _
    // Predicated region
    $region62: #{tpu_custom_call.1} parent=1 // pred_check
      _
    $region63: #{tpu_custom_call.1} parent=1 // pred_check_branch
      %731 = sbr.rel (0) target = $region65
    $region64: #{tpu_custom_call.1} parent=1 // pred_region
      %732 = dma.done [#allocation4], 256
    $region65: #{tpu_custom_call.1} parent=1 // pred_fallthru
      _
    %733 = vsyncpa [#allocation3], 1
    %734 = vsyncpa [#allocation6], 1
    %735 = vsyncpa [#allocation9], 1
    %736 = vsyncpa [#allocation4], 1

</llo_original>
